<compile_context>
chip_gen: v5e
topology: v5e:2x2
jax: 0.10.0
libtpu: 0.0.40
codegen_flags: <defaults>
</compile_context>

<pallas_src>
import functools

import jax
import jax.numpy as jnp
from jax import lax
from jax.experimental import pallas as pl
from jax.experimental.pallas import tpu as pltpu


def mlp_kernel(x_ref, w1_ref, b1_ref, w2_ref, b2_ref, w3_ref, b3_ref,
               w4_ref, b4_ref, o_ref, *, compute_dtype):
    # x_ref: (Bt, D) in the natural (B, D) layout. Weights are PyTorch layout
    # (out, in) and already in compute_dtype (pre-cast once in the wrapper).
    # Layer 1 contracts on x's last dim: (32, D) x (Bt, D) -> (32, Bt), putting
    # the batch in the lane dim for every intermediate. MXU accumulates in f32;
    # bias add / ReLU are f32 on the VPU.
    x = x_ref[...].astype(compute_dtype)          # no-op when compute_dtype==f32
    dn = (((1,), (1,)), ((), ()))                 # contract W dim 1 with x dim 1
    h = lax.dot_general(w1_ref[...], x, dn,
                        preferred_element_type=jnp.float32) + b1_ref[...]
    h = jnp.maximum(h, 0.0)
    h = jnp.dot(w2_ref[...], h.astype(compute_dtype),
                preferred_element_type=jnp.float32) + b2_ref[...]
    h = jnp.maximum(h, 0.0)
    h = jnp.dot(w3_ref[...], h.astype(compute_dtype),
                preferred_element_type=jnp.float32) + b3_ref[...]
    h = jnp.maximum(h, 0.0)
    # TODO(synk): if a bundle dump ever shows this (1,8)@(8,Bt) matmul's MXU
    # fill/drain on the critical path, switch layer 4 to a VPU multiply-add.
    y = jnp.dot(w4_ref[...], h.astype(compute_dtype),
                preferred_element_type=jnp.float32) + b4_ref[...]
    o_ref[...] = y.astype(o_ref.dtype)


def _pick_batch_tile(B, cap=8192):
    """Lane-dense batch tile: multiple of 128, <= cap, and >= 2 grid steps
    whenever B allows it (keeps both v7x TensorCores busy)."""
    if B <= 128:
        return B                                    # single full-extent block
    half = (B // 2) // 128 * 128                    # biggest tile with >= 2 steps
    return max(min(cap, half), 128)


@functools.partial(jax.jit, static_argnames=("batch_tile", "compute_dtype"))
def my_model_forward(x, params, batch_tile=None, compute_dtype=jnp.bfloat16):
    """x: (B, input_dim) float32 -> (B,) float32 (matches My_Model.forward)."""
    (w1, b1), (w2, b2), (w3, b3), (w4, b4) = params  # PyTorch layout: W (out,in), b (out,)
    B, D = x.shape
    if batch_tile is None:
        batch_tile = _pick_batch_tile(B)
    grid = (pl.cdiv(B, batch_tile),)

    # Resident weights: cast once to the matmul operand dtype (bf16 by default
    # -> ~3x fewer MXU passes). Biases stay f32: they add onto f32 accumulators.
    w1c = w1.astype(compute_dtype)
    w2c = w2.astype(compute_dtype)
    w3c = w3.astype(compute_dtype)
    w4c = w4.astype(compute_dtype)
    b1c = b1.reshape(-1, 1).astype(jnp.float32)      # (32, 1)
    b2c = b2.reshape(-1, 1).astype(jnp.float32)      # (16, 1)
    b3c = b3.reshape(-1, 1).astype(jnp.float32)      # (8, 1)
    b4c = b4.reshape(-1, 1).astype(jnp.float32)      # (1, 1)

    def x_map(i):
        return (i, 0)

    def out_map(i):
        return (0, i)

    def fixed_map(i):
        return (0, 0)

    kernel = functools.partial(mlp_kernel, compute_dtype=compute_dtype)

    weight_bytes = sum(int(a.size) * a.dtype.itemsize
                       for a in (w1c, w2c, w3c, w4c, b1c, b2c, b3c, b4c))
    cost = pl.CostEstimate(
        flops=2 * B * (D * 32 + 32 * 16 + 16 * 8 + 8 * 1),
        transcendentals=0,
        bytes_accessed=int(x.size) * x.dtype.itemsize + weight_bytes + 4 * B)

    out = pl.pallas_call(
        kernel,
        out_shape=jax.ShapeDtypeStruct((1, B), jnp.float32),
        grid_spec=pltpu.PrefetchScalarGridSpec(
            num_scalar_prefetch=0,
            grid=grid,
            in_specs=[
                pl.BlockSpec((batch_tile, D), x_map),   # x tile, natural layout
                pl.BlockSpec((32, D), fixed_map),       # w1 (resident)
                pl.BlockSpec((32, 1), fixed_map),       # b1
                pl.BlockSpec((16, 32), fixed_map),      # w2
                pl.BlockSpec((16, 1), fixed_map),       # b2
                pl.BlockSpec((8, 16), fixed_map),       # w3
                pl.BlockSpec((8, 1), fixed_map),        # b3
                pl.BlockSpec((1, 8), fixed_map),        # w4
                pl.BlockSpec((1, 1), fixed_map),        # b4
            ],
            out_specs=pl.BlockSpec((1, batch_tile), out_map),  # lane-dense output
        ),
        compiler_params=pltpu.CompilerParams(
            dimension_semantics=("parallel",),
            vmem_limit_bytes=32 * 1024 * 1024),
        cost_estimate=cost,
    )(x, w1c, b1c, w2c, b2c, w3c, b3c, w4c, b4c)

    # squeeze(1) from the PyTorch forward: (1, B) -> (B,) is a free reshape.
    return out.reshape(B)


def init_params(key, input_dim):
    """Deterministic init mimicking nn.Linear (uniform +-1/sqrt(fan_in)),
    stored in PyTorch layout: weight (out, in), bias (out,)."""
    dims = [(input_dim, 32), (32, 16), (16, 8), (8, 1)]
    params = []
    for fan_in, fan_out in dims:
        key, kw, kb = jax.random.split(key, 3)
        bound = float(1.0 / (fan_in ** 0.5))
        w = jax.random.uniform(kw, (fan_out, fan_in), jnp.float32, -bound, bound)
        b = jax.random.uniform(kb, (fan_out,), jnp.float32, -bound, bound)
        params.append((w, b))
    return params


def reference_forward(x, params):
    h = x
    for i, (w, b) in enumerate(params):
        h = h @ w.T + b
        if i < len(params) - 1:
            h = jnp.maximum(h, 0.0)
    return h[:, 0]


if __name__ == "__main__":
    key = jax.random.PRNGKey(0)
    key, kx1, kx2 = jax.random.split(key, 3)

    input_dim = 16
    params = init_params(key, input_dim)

    # 1) f32 path, B multiple of 128 (tile 128, grid 2): exact vs reference.
    batch = 256
    x = jax.random.normal(kx1, (batch, input_dim), jnp.float32)
    out = jax.block_until_ready(
        my_model_forward(x, params, compute_dtype=jnp.float32))
    ref = reference_forward(x, params)
    assert out.shape == (batch,)
    assert jnp.allclose(out, ref, atol=1e-4, rtol=1e-4), (
        float(jnp.max(jnp.abs(out - ref))))

    # 2) f32 path, ragged batch (B % 128 != 0): padded last block must clip.
    batch_r = 300
    x_r = jax.random.normal(kx2, (batch_r, input_dim), jnp.float32)
    out_r = jax.block_until_ready(
        my_model_forward(x_r, params, compute_dtype=jnp.float32))
    ref_r = reference_forward(x_r, params)
    assert out_r.shape == (batch_r,)
    assert jnp.allclose(out_r, ref_r, atol=1e-4, rtol=1e-4), (
        float(jnp.max(jnp.abs(out_r - ref_r))))

    # 3) default bf16-operand path (f32 accumulation): loose tolerance.
    out_bf = jax.block_until_ready(my_model_forward(x, params))
    assert out_bf.shape == (batch,)
    assert jnp.allclose(out_bf, ref, atol=5e-2, rtol=5e-2), (
        float(jnp.max(jnp.abs(out_bf - ref))))

    print("KERNEL_OK")
</pallas_src>

<mosaic_0001>
module attributes {stable_mosaic.version = 11 : i64} {
  func.func @mlp_kernel(%arg0: i32, %arg1: memref<128x16xf32, #tpu.memory_space<vmem>>, %arg2: memref<32x16xf32, #tpu.memory_space<vmem>>, %arg3: memref<32x1xf32, #tpu.memory_space<vmem>>, %arg4: memref<16x32xf32, #tpu.memory_space<vmem>>, %arg5: memref<16x1xf32, #tpu.memory_space<vmem>>, %arg6: memref<8x16xf32, #tpu.memory_space<vmem>>, %arg7: memref<8x1xf32, #tpu.memory_space<vmem>>, %arg8: memref<1x8xf32, #tpu.memory_space<vmem>>, %arg9: memref<1x1xf32, #tpu.memory_space<vmem>>, %arg10: memref<1x128xf32, #tpu.memory_space<vmem>>) attributes {dimension_semantics = [#tpu.dimension_semantics<parallel>], iteration_bounds = array<i64: 2>, scalar_prefetch = 0 : i64, scratch_operands = 0 : i64, tpu.core_type = #tpu.core_type<tc>, window_params = [{transform_indices = @transform_0, window_bounds = array<i64: 128, 16>}, {pipeline_mode = #tpu.pipeline_mode<synchronous>, transform_indices = @transform_1, window_bounds = array<i64: 32, 16>}, {pipeline_mode = #tpu.pipeline_mode<synchronous>, transform_indices = @transform_2, window_bounds = array<i64: 32, 1>}, {pipeline_mode = #tpu.pipeline_mode<synchronous>, transform_indices = @transform_3, window_bounds = array<i64: 16, 32>}, {pipeline_mode = #tpu.pipeline_mode<synchronous>, transform_indices = @transform_4, window_bounds = array<i64: 16, 1>}, {pipeline_mode = #tpu.pipeline_mode<synchronous>, transform_indices = @transform_5, window_bounds = array<i64: 8, 16>}, {pipeline_mode = #tpu.pipeline_mode<synchronous>, transform_indices = @transform_6, window_bounds = array<i64: 8, 1>}, {pipeline_mode = #tpu.pipeline_mode<synchronous>, transform_indices = @transform_7, window_bounds = array<i64: 1, 8>}, {pipeline_mode = #tpu.pipeline_mode<synchronous>, transform_indices = @transform_8, window_bounds = array<i64: 1, 1>}, {transform_indices = @transform_9, window_bounds = array<i64: 1, 128>}]} {
    %c0 = arith.constant 0 : index
    %c0_0 = arith.constant 0 : index
    %0 = vector.load %arg1[%c0, %c0_0] : memref<128x16xf32, #tpu.memory_space<vmem>>, vector<128x16xf32>
    %c0_1 = arith.constant 0 : index
    %c0_2 = arith.constant 0 : index
    %1 = vector.load %arg2[%c0_1, %c0_2] : memref<32x16xf32, #tpu.memory_space<vmem>>, vector<32x16xf32>
    %cst = arith.constant dense<0.000000e+00> : vector<32x128xf32>
    %2 = tpu.matmul %1, %0, %cst {dimension_numbers = #tpu.dot_dimension_numbers<[1], [1], [0], [0], [0, 0, 1, 0], [], []>} : vector<32x16xf32>, vector<128x16xf32>, vector<32x128xf32> -> vector<32x128xf32>
    %c0_3 = arith.constant 0 : index
    %c0_4 = arith.constant 0 : index
    %3 = vector.load %arg3[%c0_3, %c0_4] : memref<32x1xf32, #tpu.memory_space<vmem>>, vector<32x1xf32>
    %4 = vector.broadcast %3 : vector<32x1xf32> to vector<32x128xf32>
    %5 = arith.addf %2, %4 : vector<32x128xf32>
    %cst_5 = arith.constant 0.000000e+00 : f32
    %6 = vector.broadcast %cst_5 : f32 to vector<32x128xf32>
    %7 = arith.maximumf %5, %6 : vector<32x128xf32>
    %c0_6 = arith.constant 0 : index
    %c0_7 = arith.constant 0 : index
    %8 = vector.load %arg4[%c0_6, %c0_7] : memref<16x32xf32, #tpu.memory_space<vmem>>, vector<16x32xf32>
    %cst_8 = arith.constant dense<0.000000e+00> : vector<16x128xf32>
    %9 = tpu.matmul %8, %7, %cst_8 {dimension_numbers = #tpu.dot_dimension_numbers<[1], [0], [0], [1], [0, 0, 1, 1], [], []>} : vector<16x32xf32>, vector<32x128xf32>, vector<16x128xf32> -> vector<16x128xf32>
    %c0_9 = arith.constant 0 : index
    %c0_10 = arith.constant 0 : index
    %10 = vector.load %arg5[%c0_9, %c0_10] : memref<16x1xf32, #tpu.memory_space<vmem>>, vector<16x1xf32>
    %11 = vector.broadcast %10 : vector<16x1xf32> to vector<16x128xf32>
    %12 = arith.addf %9, %11 : vector<16x128xf32>
    %cst_11 = arith.constant 0.000000e+00 : f32
    %13 = vector.broadcast %cst_11 : f32 to vector<16x128xf32>
    %14 = arith.maximumf %12, %13 : vector<16x128xf32>
    %c0_12 = arith.constant 0 : index
    %c0_13 = arith.constant 0 : index
    %15 = vector.load %arg6[%c0_12, %c0_13] : memref<8x16xf32, #tpu.memory_space<vmem>>, vector<8x16xf32>
    %cst_14 = arith.constant dense<0.000000e+00> : vector<8x128xf32>
    %16 = tpu.matmul %15, %14, %cst_14 {dimension_numbers = #tpu.dot_dimension_numbers<[1], [0], [0], [1], [0, 0, 1, 1], [], []>} : vector<8x16xf32>, vector<16x128xf32>, vector<8x128xf32> -> vector<8x128xf32>
    %c0_15 = arith.constant 0 : index
    %c0_16 = arith.constant 0 : index
    %17 = vector.load %arg7[%c0_15, %c0_16] : memref<8x1xf32, #tpu.memory_space<vmem>>, vector<8x1xf32>
    %18 = vector.broadcast %17 : vector<8x1xf32> to vector<8x128xf32>
    %19 = arith.addf %16, %18 : vector<8x128xf32>
    %cst_17 = arith.constant 0.000000e+00 : f32
    %20 = vector.broadcast %cst_17 : f32 to vector<8x128xf32>
    %21 = arith.maximumf %19, %20 : vector<8x128xf32>
    %c0_18 = arith.constant 0 : index
    %c0_19 = arith.constant 0 : index
    %22 = vector.load %arg8[%c0_18, %c0_19] : memref<1x8xf32, #tpu.memory_space<vmem>>, vector<1x8xf32>
    %cst_20 = arith.constant dense<0.000000e+00> : vector<1x128xf32>
    %23 = tpu.matmul %22, %21, %cst_20 {dimension_numbers = #tpu.dot_dimension_numbers<[1], [0], [0], [1], [0, 0, 1, 1], [], []>} : vector<1x8xf32>, vector<8x128xf32>, vector<1x128xf32> -> vector<1x128xf32>
    %c0_21 = arith.constant 0 : index
    %c0_22 = arith.constant 0 : index
    %24 = vector.load %arg9[%c0_21, %c0_22] : memref<1x1xf32, #tpu.memory_space<vmem>>, vector<1x1xf32>
    %25 = vector.broadcast %24 : vector<1x1xf32> to vector<1x128xf32>
    %26 = arith.addf %23, %25 : vector<1x128xf32>
    %c0_23 = arith.constant 0 : index
    %c0_24 = arith.constant 0 : index
    %27 = vector.load %arg10[%c0_23, %c0_24] : memref<1x128xf32, #tpu.memory_space<vmem>>, vector<1x128xf32>
    tpu.vector_store %arg10[%c0_23, %c0_24], %26 {strides = array<i32>} : memref<1x128xf32, #tpu.memory_space<vmem>>, vector<1x128xf32>,
    return
  }
  func.func @transform_0(%arg0: i32) -> (i32, i32) {
    %c0_i32 = arith.constant 0 : i32
    %c0_i32_0 = arith.constant 0 : i32
    return %arg0, %c0_i32 : i32, i32
  }
  func.func @transform_1(%arg0: i32) -> (i32, i32) {
    %c0_i32 = arith.constant 0 : i32
    %c0_i32_0 = arith.constant 0 : i32
    %c0_i32_1 = arith.constant 0 : i32
    return %c0_i32, %c0_i32_0 : i32, i32
  }
  func.func @transform_2(%arg0: i32) -> (i32, i32) {
    %c0_i32 = arith.constant 0 : i32
    %c0_i32_0 = arith.constant 0 : i32
    %c0_i32_1 = arith.constant 0 : i32
    return %c0_i32, %c0_i32_0 : i32, i32
  }
  func.func @transform_3(%arg0: i32) -> (i32, i32) {
    %c0_i32 = arith.constant 0 : i32
    %c0_i32_0 = arith.constant 0 : i32
    %c0_i32_1 = arith.constant 0 : i32
    return %c0_i32, %c0_i32_0 : i32, i32
  }
  func.func @transform_4(%arg0: i32) -> (i32, i32) {
    %c0_i32 = arith.constant 0 : i32
    %c0_i32_0 = arith.constant 0 : i32
    %c0_i32_1 = arith.constant 0 : i32
    return %c0_i32, %c0_i32_0 : i32, i32
  }
  func.func @transform_5(%arg0: i32) -> (i32, i32) {
    %c0_i32 = arith.constant 0 : i32
    %c0_i32_0 = arith.constant 0 : i32
    %c0_i32_1 = arith.constant 0 : i32
    return %c0_i32, %c0_i32_0 : i32, i32
  }
  func.func @transform_6(%arg0: i32) -> (i32, i32) {
    %c0_i32 = arith.constant 0 : i32
    %c0_i32_0 = arith.constant 0 : i32
    %c0_i32_1 = arith.constant 0 : i32
    return %c0_i32, %c0_i32_0 : i32, i32
  }
  func.func @transform_7(%arg0: i32) -> (i32, i32) {
    %c0_i32 = arith.constant 0 : i32
    %c0_i32_0 = arith.constant 0 : i32
    %c0_i32_1 = arith.constant 0 : i32
    return %c0_i32, %c0_i32_0 : i32, i32
  }
  func.func @transform_8(%arg0: i32) -> (i32, i32) {
    %c0_i32 = arith.constant 0 : i32
    %c0_i32_0 = arith.constant 0 : i32
    %c0_i32_1 = arith.constant 0 : i32
    return %c0_i32, %c0_i32_0 : i32, i32
  }
  func.func @transform_9(%arg0: i32) -> (i32, i32) {
    %c0_i32 = arith.constant 0 : i32
    %c0_i32_0 = arith.constant 0 : i32
    return %c0_i32, %arg0 : i32, i32
  }
}

</mosaic_0001>

<llo_original>
// kernel: my_model_forward.1
$region0: #{my_model_forward.1}
  #allocation0 [shape = 'u32[]', space=smem, size = 0x4, offset = 0x4, fixed_abs, tag = 'smem constant byte address 0x4 - core index']
  #allocation1 [shape = 'u32[72,128]{1,0:T(1,128)}', space=vmem, size = 0x9000, scoped, tag = 'internal scratch']
  #allocation2 [shape = 'f32[1,1]{1,0:T(1,128)S(1)}', space=vmem, size = 0x200, scoped, tag = 'scoped memory for my_model_forward.1']
  %s0 = inlined_call_operand.vmem [shape: f32[256,16], index: 0, kind: input, shape index: {}]
  %s1 = inlined_call_operand.vmem [shape: f32[32,16], index: 1, kind: input, shape index: {}]
  %s2 = inlined_call_operand.vmem [shape: f32[32,1], index: 2, kind: input, shape index: {}]
  %s3 = inlined_call_operand.vmem [shape: f32[16,32], index: 3, kind: input, shape index: {}]
  %s4 = inlined_call_operand.vmem [shape: f32[16,1], index: 4, kind: input, shape index: {}]
  %s5 = inlined_call_operand.vmem [shape: f32[8,16], index: 5, kind: input, shape index: {}]
  %s6 = inlined_call_operand.vmem [shape: f32[8,1], index: 6, kind: input, shape index: {}]
  %s7 = inlined_call_operand.vmem [shape: f32[1,8], index: 7, kind: input, shape index: {}]
  %s8 = inlined_call_operand.<no memory space> [shape: f32[1,1], index: 8, kind: input, shape index: {}]
  %s9 = inlined_call_operand.hbm [shape: f32[1,256], index: 9, kind: output, shape index: {}]
  %s10 = sld [smem:[#allocation0]]
  $region69: #{my_model_forward.1} parent=0
    _
  %s12 = ssub.s32 1, %s10
  %s13 = scalar_select 0, %s12, %s10
  %v14 = vstv %s8
  %15 = vst [vmem:[#allocation2] sm:$0x1] %v14
  $region1: #{my_model_forward.1} parent=0
    #allocation3 [shape = 'u8[1024]{0}', space=vmem, size = 0x400, scoped, tag = 'output window, operand 0']
    #allocation4 [shape = 's32[2]{0}', space=sflag, size = 0x8, scoped, tag = 'scoped memory for my_model_forward.1']
    %16 = vsyncpa [#allocation4], 0
    %s17 = scalar_lea.sflag [#allocation4], 1
    %18 = vsyncpa %s17, 0
    loop: start=0, step=1, limit=4
    $region2: #{my_model_forward.1} parent=1 // loop_pre_header
      _
    $region3: #{my_model_forward.1} parent=1 // loop_header
      %s20 = sphi 0, %s24
      %p21 = scmp.ge.s32.totalorder %s20, 4
      %s30 = sphi 0, %s32
      %s33 = sphi 0, %s30
      %s34 = sphi 0, %s33
      %s50 = sphi 0, %s34
      %s54 = sphi 0, %s54
      %s56 = sphi 0, %s54
      %s57 = sphi 0, %s56
      %s71 = sphi 0, %s57
      %s75 = sphi 0, %s75
      %s77 = sphi 0, %s75
      %s78 = sphi 0, %s77
      %s92 = sphi 0, %s78
      %s96 = sphi 0, %s96
      %s98 = sphi 0, %s96
      %s99 = sphi 0, %s98
      %s113 = sphi 0, %s99
      %s117 = sphi 0, %s117
      %s119 = sphi 0, %s117
      %s120 = sphi 0, %s119
      %s134 = sphi 0, %s120
      %s138 = sphi 0, %s138
      %s140 = sphi 0, %s138
      %s141 = sphi 0, %s140
      %s155 = sphi 0, %s141
      %s159 = sphi 0, %s159
      %s161 = sphi 0, %s159
      %s162 = sphi 0, %s161
      %s176 = sphi 0, %s162
      %s180 = sphi 0, %s180
      %s182 = sphi 0, %s180
      %s183 = sphi 0, %s182
      %s197 = sphi 0, %s183
      %s201 = sphi 0, %s201
      %s203 = sphi 0, %s201
      %s204 = sphi 0, %s203
      %s218 = sphi 0, %s204
      %s224 = sphi 0, %s226
      %s227 = sphi 0, %s224
      %s228 = sphi 0, %s227
      %s244 = sphi 0, %s228
    $region4: #{my_model_forward.1} parent=1 // loop_header_branch
      %23 = sbr.rel (%p21) target = $region8
    $region5: #{my_model_forward.1} parent=1 // loop_body
      %s25 = ssub.s32 %s20, 1
      %s26 = ssub.s32 %s20, 2
      %s27 = sadd.s32 %s20, 1
      %s28 = ssub.s32 %s20, %s27
      %p29 = scmp.eq.s32.totalorder %s28, 0
      %s31 = sadd.s32 %s30, 1
      %s32 = scalar_select %p29, %s30, %s31
      %p35 = pneg %p29
      %p36 = scmp.eq.s32.totalorder %s20, 1
      %p37 = por %p35, %p36
      %p38 = scmp.ne.s32.totalorder %s30, %s33
      %p39 = scmp.eq.s32.totalorder %s20, 0
      %p40 = por %p38, %p39
      %p41 = scmp.ne.s32.totalorder %s30, %s33
      %p42 = scmp.eq.s32.totalorder %s25, 1
      %p43 = por %p41, %p42
      %p44 = scmp.ne.s32.totalorder %s33, %s34
      %p45 = scmp.eq.s32.totalorder %s25, 0
      %p46 = por %p44, %p45
      %p47 = scmp.ne.s32.totalorder %s33, %s34
      %p48 = scmp.eq.s32.totalorder %s26, 1
      %p49 = por %p47, %p48
      %p51 = scmp.ne.s32.totalorder %s34, %s50
      %p52 = scmp.eq.s32.totalorder %s26, 0
      %p53 = por %p51, %p52
      %s55 = sadd.s32 %s54, 1
      %p58 = scmp.eq.s32.totalorder %s20, 1
      %p59 = scmp.ne.s32.totalorder %s54, %s56
      %p60 = scmp.eq.s32.totalorder %s20, 0
      %p61 = por %p59, %p60
      %p62 = scmp.ne.s32.totalorder %s54, %s56
      %p63 = scmp.eq.s32.totalorder %s25, 1
      %p64 = por %p62, %p63
      %p65 = scmp.ne.s32.totalorder %s56, %s57
      %p66 = scmp.eq.s32.totalorder %s25, 0
      %p67 = por %p65, %p66
      %p68 = scmp.ne.s32.totalorder %s56, %s57
      %p69 = scmp.eq.s32.totalorder %s26, 1
      %p70 = por %p68, %p69
      %p72 = scmp.ne.s32.totalorder %s57, %s71
      %p73 = scmp.eq.s32.totalorder %s26, 0
      %p74 = por %p72, %p73
      %s76 = sadd.s32 %s75, 1
      %p79 = scmp.eq.s32.totalorder %s20, 1
      %p80 = scmp.ne.s32.totalorder %s75, %s77
      %p81 = scmp.eq.s32.totalorder %s20, 0
      %p82 = por %p80, %p81
      %p83 = scmp.ne.s32.totalorder %s75, %s77
      %p84 = scmp.eq.s32.totalorder %s25, 1
      %p85 = por %p83, %p84
      %p86 = scmp.ne.s32.totalorder %s77, %s78
      %p87 = scmp.eq.s32.totalorder %s25, 0
      %p88 = por %p86, %p87
      %p89 = scmp.ne.s32.totalorder %s77, %s78
      %p90 = scmp.eq.s32.totalorder %s26, 1
      %p91 = por %p89, %p90
      %p93 = scmp.ne.s32.totalorder %s78, %s92
      %p94 = scmp.eq.s32.totalorder %s26, 0
      %p95 = por %p93, %p94
      %s97 = sadd.s32 %s96, 1
      %p100 = scmp.eq.s32.totalorder %s20, 1
      %p101 = scmp.ne.s32.totalorder %s96, %s98
      %p102 = scmp.eq.s32.totalorder %s20, 0
      %p103 = por %p101, %p102
      %p104 = scmp.ne.s32.totalorder %s96, %s98
      %p105 = scmp.eq.s32.totalorder %s25, 1
      %p106 = por %p104, %p105
      %p107 = scmp.ne.s32.totalorder %s98, %s99
      %p108 = scmp.eq.s32.totalorder %s25, 0
      %p109 = por %p107, %p108
      %p110 = scmp.ne.s32.totalorder %s98, %s99
      %p111 = scmp.eq.s32.totalorder %s26, 1
      %p112 = por %p110, %p111
      %p114 = scmp.ne.s32.totalorder %s99, %s113
      %p115 = scmp.eq.s32.totalorder %s26, 0
      %p116 = por %p114, %p115
      %s118 = sadd.s32 %s117, 1
      %p121 = scmp.eq.s32.totalorder %s20, 1
      %p122 = scmp.ne.s32.totalorder %s117, %s119
      %p123 = scmp.eq.s32.totalorder %s20, 0
      %p124 = por %p122, %p123
      %p125 = scmp.ne.s32.totalorder %s117, %s119
      %p126 = scmp.eq.s32.totalorder %s25, 1
      %p127 = por %p125, %p126
      %p128 = scmp.ne.s32.totalorder %s119, %s120
      %p129 = scmp.eq.s32.totalorder %s25, 0
      %p130 = por %p128, %p129
      %p131 = scmp.ne.s32.totalorder %s119, %s120
      %p132 = scmp.eq.s32.totalorder %s26, 1
      %p133 = por %p131, %p132
      %p135 = scmp.ne.s32.totalorder %s120, %s134
      %p136 = scmp.eq.s32.totalorder %s26, 0
      %p137 = por %p135, %p136
      %s139 = sadd.s32 %s138, 1
      %p142 = scmp.eq.s32.totalorder %s20, 1
      %p143 = scmp.ne.s32.totalorder %s138, %s140
      %p144 = scmp.eq.s32.totalorder %s20, 0
      %p145 = por %p143, %p144
      %p146 = scmp.ne.s32.totalorder %s138, %s140
      %p147 = scmp.eq.s32.totalorder %s25, 1
      %p148 = por %p146, %p147
      %p149 = scmp.ne.s32.totalorder %s140, %s141
      %p150 = scmp.eq.s32.totalorder %s25, 0
      %p151 = por %p149, %p150
      %p152 = scmp.ne.s32.totalorder %s140, %s141
      %p153 = scmp.eq.s32.totalorder %s26, 1
      %p154 = por %p152, %p153
      %p156 = scmp.ne.s32.totalorder %s141, %s155
      %p157 = scmp.eq.s32.totalorder %s26, 0
      %p158 = por %p156, %p157
      %s160 = sadd.s32 %s159, 1
      %p163 = scmp.eq.s32.totalorder %s20, 1
      %p164 = scmp.ne.s32.totalorder %s159, %s161
      %p165 = scmp.eq.s32.totalorder %s20, 0
      %p166 = por %p164, %p165
      %p167 = scmp.ne.s32.totalorder %s159, %s161
      %p168 = scmp.eq.s32.totalorder %s25, 1
      %p169 = por %p167, %p168
      %p170 = scmp.ne.s32.totalorder %s161, %s162
      %p171 = scmp.eq.s32.totalorder %s25, 0
      %p172 = por %p170, %p171
      %p173 = scmp.ne.s32.totalorder %s161, %s162
      %p174 = scmp.eq.s32.totalorder %s26, 1
      %p175 = por %p173, %p174
      %p177 = scmp.ne.s32.totalorder %s162, %s176
      %p178 = scmp.eq.s32.totalorder %s26, 0
      %p179 = por %p177, %p178
      %s181 = sadd.s32 %s180, 1
      %p184 = scmp.eq.s32.totalorder %s20, 1
      %p185 = scmp.ne.s32.totalorder %s180, %s182
      %p186 = scmp.eq.s32.totalorder %s20, 0
      %p187 = por %p185, %p186
      %p188 = scmp.ne.s32.totalorder %s180, %s182
      %p189 = scmp.eq.s32.totalorder %s25, 1
      %p190 = por %p188, %p189
      %p191 = scmp.ne.s32.totalorder %s182, %s183
      %p192 = scmp.eq.s32.totalorder %s25, 0
      %p193 = por %p191, %p192
      %p194 = scmp.ne.s32.totalorder %s182, %s183
      %p195 = scmp.eq.s32.totalorder %s26, 1
      %p196 = por %p194, %p195
      %p198 = scmp.ne.s32.totalorder %s183, %s197
      %p199 = scmp.eq.s32.totalorder %s26, 0
      %p200 = por %p198, %p199
      %s202 = sadd.s32 %s201, 1
      %p205 = scmp.eq.s32.totalorder %s20, 1
      %p206 = scmp.ne.s32.totalorder %s201, %s203
      %p207 = scmp.eq.s32.totalorder %s20, 0
      %p208 = por %p206, %p207
      %p209 = scmp.ne.s32.totalorder %s201, %s203
      %p210 = scmp.eq.s32.totalorder %s25, 1
      %p211 = por %p209, %p210
      %p212 = scmp.ne.s32.totalorder %s203, %s204
      %p213 = scmp.eq.s32.totalorder %s25, 0
      %p214 = por %p212, %p213
      %p215 = scmp.ne.s32.totalorder %s203, %s204
      %p216 = scmp.eq.s32.totalorder %s26, 1
      %p217 = por %p215, %p216
      %p219 = scmp.ne.s32.totalorder %s204, %s218
      %p220 = scmp.eq.s32.totalorder %s26, 0
      %p221 = por %p219, %p220
      %s222 = ssub.s32 %s20, %s27
      %p223 = scmp.eq.s32.totalorder %s222, 0
      %s225 = sadd.s32 %s224, 1
      %s226 = scalar_select %p223, %s224, %s225
      %p229 = pneg %p223
      %p230 = scmp.eq.s32.totalorder %s20, 1
      %p231 = por %p229, %p230
      %p232 = scmp.ne.s32.totalorder %s224, %s227
      %p233 = scmp.eq.s32.totalorder %s20, 0
      %p234 = por %p232, %p233
      %p235 = scmp.ne.s32.totalorder %s224, %s227
      %p236 = scmp.eq.s32.totalorder %s25, 1
      %p237 = por %p235, %p236
      %p238 = scmp.ne.s32.totalorder %s227, %s228
      %p239 = scmp.eq.s32.totalorder %s25, 0
      %p240 = por %p238, %p239
      %p241 = scmp.ne.s32.totalorder %s227, %s228
      %p242 = scmp.eq.s32.totalorder %s26, 1
      %p243 = por %p241, %p242
      %p245 = scmp.ne.s32.totalorder %s228, %s244
      %p246 = scmp.eq.s32.totalorder %s26, 0
      %p247 = por %p245, %p246
      %p248 = scmp.le.s32.totalorder 1, %s20
      %p249 = scmp.lt.s32.totalorder %s20, 3
      %p250 = pnand %p248, %p249
      %p251 = pneg %p250
      // Predicated region
      $region9: #{my_model_forward.1} parent=5 // pred_check
        _
      $region10: #{my_model_forward.1} parent=5 // pred_check_branch
        %253 = sbr.rel (%p250) target = $region12
      $region11: #{my_model_forward.1} parent=5 // pred_region
        %s254 = ssub.s32 %s20, 1
        // Predicated region
        $region13: #{my_model_forward.1} parent=11 // pred_check
          %p255 = pneg %p67
        $region14: #{my_model_forward.1} parent=11 // pred_check_branch
          %257 = sbr.rel (%p255) target = $region16
        $region15: #{my_model_forward.1} parent=11 // pred_region
          _
        $region16: #{my_model_forward.1} parent=11 // pred_fallthru
          _
        // Predicated region
        $region17: #{my_model_forward.1} parent=11 // pred_check
          %p258 = pneg %p88
        $region18: #{my_model_forward.1} parent=11 // pred_check_branch
          %260 = sbr.rel (%p258) target = $region20
        $region19: #{my_model_forward.1} parent=11 // pred_region
          _
        $region20: #{my_model_forward.1} parent=11 // pred_fallthru
          _
        // Predicated region
        $region21: #{my_model_forward.1} parent=11 // pred_check
          %p261 = pneg %p109
        $region22: #{my_model_forward.1} parent=11 // pred_check_branch
          %263 = sbr.rel (%p261) target = $region24
        $region23: #{my_model_forward.1} parent=11 // pred_region
          _
        $region24: #{my_model_forward.1} parent=11 // pred_fallthru
          _
        // Predicated region
        $region25: #{my_model_forward.1} parent=11 // pred_check
          %p264 = pneg %p130
        $region26: #{my_model_forward.1} parent=11 // pred_check_branch
          %266 = sbr.rel (%p264) target = $region28
        $region27: #{my_model_forward.1} parent=11 // pred_region
          _
        $region28: #{my_model_forward.1} parent=11 // pred_fallthru
          _
        // Predicated region
        $region29: #{my_model_forward.1} parent=11 // pred_check
          %p267 = pneg %p151
        $region30: #{my_model_forward.1} parent=11 // pred_check_branch
          %269 = sbr.rel (%p267) target = $region32
        $region31: #{my_model_forward.1} parent=11 // pred_region
          _
        $region32: #{my_model_forward.1} parent=11 // pred_fallthru
          _
        // Predicated region
        $region33: #{my_model_forward.1} parent=11 // pred_check
          %p270 = pneg %p172
        $region34: #{my_model_forward.1} parent=11 // pred_check_branch
          %272 = sbr.rel (%p270) target = $region36
        $region35: #{my_model_forward.1} parent=11 // pred_region
          _
        $region36: #{my_model_forward.1} parent=11 // pred_fallthru
          _
        // Predicated region
        $region37: #{my_model_forward.1} parent=11 // pred_check
          %p273 = pneg %p193
        $region38: #{my_model_forward.1} parent=11 // pred_check_branch
          %275 = sbr.rel (%p273) target = $region40
        $region39: #{my_model_forward.1} parent=11 // pred_region
          _
        $region40: #{my_model_forward.1} parent=11 // pred_fallthru
          _
        // Predicated region
        $region41: #{my_model_forward.1} parent=11 // pred_check
          %p276 = pneg %p214
        $region42: #{my_model_forward.1} parent=11 // pred_check_branch
          %278 = sbr.rel (%p276) target = $region44
        $region43: #{my_model_forward.1} parent=11 // pred_region
          _
        $region44: #{my_model_forward.1} parent=11 // pred_fallthru
          _
      $region12: #{my_model_forward.1} parent=5 // pred_fallthru
        _
      %p279 = scmp.lt.s32.totalorder %s20, 2
      // Predicated region
      $region45: #{my_model_forward.1} parent=5 // pred_check
        %p280 = pneg %p279
      $region46: #{my_model_forward.1} parent=5 // pred_check_branch
        %282 = sbr.rel (%p280) target = $region48
      $region47: #{my_model_forward.1} parent=5 // pred_region
        // Predicated region
        $region49: #{my_model_forward.1} parent=47 // pred_check
          %p283 = pneg %p40
        $region50: #{my_model_forward.1} parent=47 // pred_check_branch
          %285 = sbr.rel (%p283) target = $region52
        $region51: #{my_model_forward.1} parent=47 // pred_region
          %s286 = smul.u32 16, %s20
          %p287 = scmp.lt.s32.totalorder %s286, 31
          %s288 = scalar_select %p287, %s286, 31
          %s289 = smul.addr %s288, 8
          %s290 = scalar_lea.vmem %s0, %s289
          %s291 = smul.u32 16, %s20
        $region52: #{my_model_forward.1} parent=47 // pred_fallthru
          _
      $region48: #{my_model_forward.1} parent=5 // pred_fallthru
        _
      %p292 = scmp.le.s32.totalorder 1, %s20
      %p293 = scmp.lt.s32.totalorder %s20, 3
      %p294 = pnand %p292, %p293
      %p295 = pneg %p294
      // Predicated region
      $region53: #{my_model_forward.1} parent=5 // pred_check
        _
      $region54: #{my_model_forward.1} parent=5 // pred_check_branch
        %297 = sbr.rel (%p294) target = $region56
      $region55: #{my_model_forward.1} parent=5 // pred_region
        %s298 = ssub.s32 %s20, 1
        %s299 = smul.u32 16, %s25
        %p300 = scmp.lt.s32.totalorder %s299, 31
        %s301 = scalar_select %p300, %s299, 31
        %s302 = smul.addr %s301, 8
        %s303 = scalar_lea.vmem %s0, %s302
        %p304 = pneg %p46
        %p305 = pneg %p43
        %p306 = pneg %p67
        %p307 = pneg %p64
        %p308 = pneg %p88
        %p309 = pneg %p85
        %p310 = pneg %p109
        %p311 = pneg %p106
        %p312 = pneg %p130
        %p313 = pneg %p127
        %p314 = pneg %p151
        %p315 = pneg %p148
        %p316 = pneg %p172
        %p317 = pneg %p169
        %p318 = pneg %p193
        %p319 = pneg %p190
        %p320 = pneg %p214
        %p321 = pneg %p211
        %p322 = pneg %p240
        %p323 = pneg %p237
        %s324 = sand.u32 %s227, 1
        %s325 = scalar_lea.sflag [#allocation4], %s324
        %s326 = sand.u32 %s227, 1
        %s327 = scalar_lea.vmem [#allocation3], %s326
        %s328 = smul.u32 16, %s25
        %p329 = scmp.lt.s32.totalorder %s328, 31
        %s330 = scalar_select %p329, %s328, 31
        %s331 = smul.addr %s330, 8
        %s332 = scalar_lea.vmem %s0, %s331
        %s333 = smul.u32 16, %s25
        %v334 = vld [vmem:[%s332] sm:$0xff]
        %v335 = vld [vmem:[%s332 + $0x8] sm:$0xff]
        %v336 = vld [vmem:[%s332 + $0x10] sm:$0xff]
        %v337 = vld [vmem:[%s332 + $0x18] sm:$0xff]
        %v338 = vld [vmem:[%s332 + $0x20] sm:$0xff]
        %v339 = vld [vmem:[%s332 + $0x28] sm:$0xff]
        %v340 = vld [vmem:[%s332 + $0x30] sm:$0xff]
        %v341 = vld [vmem:[%s332 + $0x38] sm:$0xff]
        %v342 = vld [vmem:[%s332 + $0x40] sm:$0xff]
        %v343 = vld [vmem:[%s332 + $0x48] sm:$0xff]
        %v344 = vld [vmem:[%s332 + $0x50] sm:$0xff]
        %v345 = vld [vmem:[%s332 + $0x58] sm:$0xff]
        %v346 = vld [vmem:[%s332 + $0x60] sm:$0xff]
        %v347 = vld [vmem:[%s332 + $0x68] sm:$0xff]
        %v348 = vld [vmem:[%s332 + $0x70] sm:$0xff]
        %v349 = vld [vmem:[%s332 + $0x78] sm:$0xff]
        %v350 = vld [vmem:[%s1] sm:$0xff]
        %v351 = vld [vmem:[%s1 + $0x8] sm:$0xff]
        %v352 = vld [vmem:[%s1 + $0x10] sm:$0xff]
        %v353 = vld [vmem:[%s1 + $0x18] sm:$0xff]
        %v354 = vld [vmem:[%s2] sm:$0xff]
        %v355 = vld [vmem:[%s2 + $0x8] sm:$0xff]
        %v356 = vld [vmem:[%s2 + $0x10] sm:$0xff]
        %v357 = vld [vmem:[%s2 + $0x18] sm:$0xff]
        %359 = vset.pattern.permute.xlu0 0
        %360 = vperm.xlu0 %359, %v354
        %v361 = vpop.permute.xlu0 %360
        %364 = vset.pattern.permute.xlu0 0
        %365 = vperm.xlu0 %364, %v355
        %v366 = vpop.permute.xlu0 %365
        %369 = vset.pattern.permute.xlu0 0
        %370 = vperm.xlu0 %369, %v356
        %v371 = vpop.permute.xlu0 %370
        %374 = vset.pattern.permute.xlu0 0
        %375 = vperm.xlu0 %374, %v357
        %v376 = vpop.permute.xlu0 %375
        %vm378 = vcmask 130048
        %v380 = vsel %vm378, %v350, 0
        %v383 = vsel %vm378, %v351, 0
        %v386 = vsel %vm378, %v352, 0
        %v389 = vsel %vm378, %v353, 0
        %v392 = vsel %vm378, %v334, 0
        %v395 = vsel %vm378, %v335, 0
        %v398 = vsel %vm378, %v336, 0
        %v401 = vsel %vm378, %v337, 0
        %v404 = vsel %vm378, %v338, 0
        %v407 = vsel %vm378, %v339, 0
        %v410 = vsel %vm378, %v340, 0
        %v413 = vsel %vm378, %v341, 0
        %v416 = vsel %vm378, %v342, 0
        %v419 = vsel %vm378, %v343, 0
        %v422 = vsel %vm378, %v344, 0
        %v425 = vsel %vm378, %v345, 0
        %v428 = vsel %vm378, %v346, 0
        %v431 = vsel %vm378, %v347, 0
        %v434 = vsel %vm378, %v348, 0
        %v437 = vsel %vm378, %v349, 0
        %439 = vmatpush.xpose.msra.mxu0 %v437
        %440 = vmatpush.xpose.msra.mxu0 %v434
        %441 = vmatpush.xpose.msra.mxu0 %v431
        %442 = vmatpush.xpose.msra.mxu0 %v428
        %443 = vmatpush.xpose.msra.mxu0 %v425
        %444 = vmatpush.xpose.msra.mxu0 %v422
        %445 = vmatpush.xpose.msra.mxu0 %v419
        %446 = vmatpush.xpose.msra.mxu0 %v416
        %447 = vmatpush.xpose.msra.mxu0 %v413
        %448 = vmatpush.xpose.msra.mxu0 %v410
        %449 = vmatpush.xpose.msra.mxu0 %v407
        %450 = vmatpush.xpose.msra.mxu0 %v404
        %451 = vmatpush.xpose.msra.mxu0 %v401
        %452 = vmatpush.xpose.msra.mxu0 %v398
        %453 = vmatpush.xpose.msra.mxu0 %v395
        %454 = vmatpush.xpose.msra.mxu0 %v392
        %455 = vmatmul.f32.gmra.mxu0 %v380
        %v456 = vpop.f32.mrf.mxu0
        %v457 = vadd.f32 %v361, %v456
        %458 = vmatmul.f32.gmra.mxu0 %v383
        %v459 = vpop.f32.mrf.mxu0
        %v460 = vadd.f32 %v366, %v459
        %461 = vmatmul.f32.gmra.mxu0 %v386
        %v462 = vpop.f32.mrf.mxu0
        %v463 = vadd.f32 %v371, %v462
        %464 = vmatmul.f32.gmra.mxu0 %v389
        %v465 = vpop.f32.mrf.mxu0
        %v466 = vadd.f32 %v376, %v465
        %467 = vdwg.mxu0
        %v468 = vmax.f32 %v457, 0.0
        %v469 = vmax.f32 %v460, 0.0
        %v470 = vmax.f32 %v463, 0.0
        %v471 = vmax.f32 %v466, 0.0
        %v472 = vld [vmem:[%s3] sm:$0xff]
        %v473 = vld [vmem:[%s3 + $0x8] sm:$0xff]
        %v474 = vld [vmem:[%s4] sm:$0xff]
        %v475 = vld [vmem:[%s4 + $0x8] sm:$0xff]
        %477 = vset.pattern.permute.xlu0 0
        %478 = vperm.xlu0 %477, %v474
        %v479 = vpop.permute.xlu0 %478
        %482 = vset.pattern.permute.xlu0 0
        %483 = vperm.xlu0 %482, %v475
        %v484 = vpop.permute.xlu0 %483
        %vm486 = vcmask 261120
        %v488 = vsel %vm486, %v472, 0
        %v491 = vsel %vm486, %v473, 0
        %493 = vmatpush.msra.mxu0 0.0
        %494 = vmatpush.msra.mxu0 0.0
        %495 = vmatpush.msra.mxu0 0.0
        %496 = vmatpush.msra.mxu0 0.0
        %497 = vmatpush.msra.mxu0 0.0
        %498 = vmatpush.msra.mxu0 0.0
        %499 = vmatpush.msra.mxu0 0.0
        %500 = vmatpush.msra.mxu0 0.0
        %501 = vmatpush.msra.mxu0 0.0
        %502 = vmatpush.msra.mxu0 0.0
        %503 = vmatpush.msra.mxu0 0.0
        %504 = vmatpush.msra.mxu0 0.0
        %505 = vmatpush.msra.mxu0 %v471
        %506 = vmatpush.msra.mxu0 %v470
        %507 = vmatpush.msra.mxu0 %v469
        %508 = vmatpush.msra.mxu0 %v468
        %509 = vmatmul.f32.gmra.mxu0 %v488
        %v510 = vpop.f32.mrf.mxu0
        %v511 = vadd.f32 %v479, %v510
        %512 = vmatmul.f32.gmra.mxu0 %v491
        %v513 = vpop.f32.mrf.mxu0
        %v514 = vadd.f32 %v484, %v513
        %515 = vdwg.mxu0
        %v516 = vmax.f32 %v511, 0.0
        %v517 = vmax.f32 %v514, 0.0
        %v518 = vld [vmem:[%s5] sm:$0xff]
        %v519 = vld [vmem:[%s6] sm:$0xff]
        %521 = vset.pattern.permute.xlu0 0
        %522 = vperm.xlu0 %521, %v519
        %v523 = vpop.permute.xlu0 %522
        %v526 = vsel %vm378, %v518, 0
        %528 = vmatpush.msra.mxu0 0.0
        %529 = vmatpush.msra.mxu0 0.0
        %530 = vmatpush.msra.mxu0 0.0
        %531 = vmatpush.msra.mxu0 0.0
        %532 = vmatpush.msra.mxu0 0.0
        %533 = vmatpush.msra.mxu0 0.0
        %534 = vmatpush.msra.mxu0 0.0
        %535 = vmatpush.msra.mxu0 0.0
        %536 = vmatpush.msra.mxu0 0.0
        %537 = vmatpush.msra.mxu0 0.0
        %538 = vmatpush.msra.mxu0 0.0
        %539 = vmatpush.msra.mxu0 0.0
        %540 = vmatpush.msra.mxu0 0.0
        %541 = vmatpush.msra.mxu0 0.0
        %542 = vmatpush.msra.mxu0 %v517
        %543 = vmatpush.msra.mxu0 %v516
        %544 = vmatmul.f32.gmra.mxu0 %v526
        %v545 = vpop.f32.mrf.mxu0
        %v546 = vadd.f32 %v523, %v545
        %547 = vdwg.mxu0
        %v548 = vmax.f32 %v546, 0.0
        %v549 = vld [vmem:[%s7] sm:$0x1]
        %v550 = vld [vmem:[#allocation2] sm:$0x1]
        %552 = vset.pattern.permute.xlu0 0
        %553 = vperm.xlu0 %552, %v550
        %v554 = vpop.permute.xlu0 %553
        %v556 = vperm.slane %v554, 0
        %vm557 = vcmask 64512
        %v559 = vsel %vm557, %v549, 0
        %561 = vmatpush.msra.mxu0 0.0
        %562 = vmatpush.msra.mxu0 0.0
        %563 = vmatpush.msra.mxu0 0.0
        %564 = vmatpush.msra.mxu0 0.0
        %565 = vmatpush.msra.mxu0 0.0
        %566 = vmatpush.msra.mxu0 0.0
        %567 = vmatpush.msra.mxu0 0.0
        %568 = vmatpush.msra.mxu0 0.0
        %569 = vmatpush.msra.mxu0 0.0
        %570 = vmatpush.msra.mxu0 0.0
        %571 = vmatpush.msra.mxu0 0.0
        %572 = vmatpush.msra.mxu0 0.0
        %573 = vmatpush.msra.mxu0 0.0
        %574 = vmatpush.msra.mxu0 0.0
        %575 = vmatpush.msra.mxu0 0.0
        %576 = vmatpush.msra.mxu0 %v548
        %577 = vmatmul.f32.gmra.mxu0 %v559
        %v578 = vpop.f32.mrf.mxu0
        %v579 = vadd.f32 %v556, %v578
        %580 = vdwg.mxu0
        %581 = vst [vmem:[%s327] sm:$0x1] %v579
        %s582 = sand.u32 %s227, 1
        %s583 = scalar_lea.sflag [#allocation4], %s582
        %s584 = sand.u32 %s227, 1
        %s585 = scalar_lea.vmem [#allocation3], %s584
        // Predicated region
        $region57: #{my_model_forward.1} parent=55 // pred_check
          %p586 = pneg %p237
        $region58: #{my_model_forward.1} parent=55 // pred_check_branch
          %588 = sbr.rel (%p586) target = $region60
        $region59: #{my_model_forward.1} parent=55 // pred_region
          %590 = vsyncadd %s583, 0
          %s591 = scalar_lea.hbm %s9, %s25
          %s593 = sshll.u32 %s585, 4
          %s594 = int_to_ptr.vmem [resolvable:$true] %s593
          %s595 = sshll.u32 %s591, 4
          %s596 = int_to_ptr.hbm [resolvable:$true] %s595
          %598 = dma.vmem_to_hbm [thread:$0]  %s594, 16, %s596, %s583
        $region60: #{my_model_forward.1} parent=55 // pred_fallthru
          _
      $region56: #{my_model_forward.1} parent=5 // pred_fallthru
        _
      %p599 = scmp.le.s32.totalorder 2, %s20
      // Predicated region
      $region61: #{my_model_forward.1} parent=5 // pred_check
        %p600 = pneg %p599
      $region62: #{my_model_forward.1} parent=5 // pred_check_branch
        %602 = sbr.rel (%p600) target = $region64
      $region63: #{my_model_forward.1} parent=5 // pred_region
        %s603 = ssub.s32 %s20, 2
        // Predicated region
        $region65: #{my_model_forward.1} parent=63 // pred_check
          %p604 = pneg %p243
        $region66: #{my_model_forward.1} parent=63 // pred_check_branch
          %606 = sbr.rel (%p604) target = $region68
        $region67: #{my_model_forward.1} parent=63 // pred_region
          %s607 = sand.u32 %s228, 1
          %s608 = scalar_lea.sflag [#allocation4], %s607
          %s609 = sand.u32 %s228, 1
          %s610 = scalar_lea.vmem [#allocation3], %s609
          %612 = dma.done %s608, 16
        $region68: #{my_model_forward.1} parent=63 // pred_fallthru
          _
      $region64: #{my_model_forward.1} parent=5 // pred_fallthru
        _
    $region6: #{my_model_forward.1} parent=1 // loop_footer
      %s24 = sadd.s32 1, %s20
    $region7: #{my_model_forward.1} parent=1 // loop_footer_branch
      %19 = sbr.rel target = $region3
    $region8: #{my_model_forward.1} parent=1 // loop_exit
      _
    %613 = vsyncpa [#allocation4], 1
    %s614 = scalar_lea.sflag [#allocation4], 1
    %615 = vsyncpa %s614, 1

</llo_original>
